<compile_context>
chip_gen: v5e
topology: v5e:2x2
jax: 0.10.0
libtpu: 0.0.40
codegen_flags: <defaults>
</compile_context>

<pallas_src>
import functools

import jax
import jax.numpy as jnp
from jax.experimental import pallas as pl
from jax.experimental.pallas import tpu as pltpu


# ---------------------------------------------------------------------------
# Kernel
# ---------------------------------------------------------------------------
def _film_kernel(x_ref, y_ref, w1_ref, b1_ref, wo_ref, bo_ref, out_ref,
                 *, dim_p):
    # Fused projection: proj = x @ [Wg | Wb] + [bg | bb]   (one MXU call)
    x = x_ref[...]
    proj = jnp.dot(x, w1_ref[...], preferred_element_type=jnp.float32)
    proj = proj + b1_ref[...]
    # Static split at a multiple-of-128 boundary (layout clean).
    gamma = proj[:, :dim_p]
    beta = proj[:, dim_p:]
    # FiLM modulation on the VPU (f32 vregs).
    h = gamma * y_ref[...] + beta
    # Output projection: out = h @ Wo + bo
    out = jnp.dot(h.astype(wo_ref.dtype), wo_ref[...],
                  preferred_element_type=jnp.float32)
    out = out + bo_ref[...]
    out_ref[...] = out.astype(out_ref.dtype)


# ---------------------------------------------------------------------------
# Parameter preparation (one-time): transpose, fuse gamma/beta, zero-pad to
# lane-dense (multiple-of-128) shapes.
# ---------------------------------------------------------------------------
def _round_up(n, m):
    return ((n + m - 1) // m) * m


def prepare_params(params, *, lane=128):
    fc_w = params["fc_w"]          # [2*dim, D]   (PyTorch layout)
    fc_b = params["fc_b"]          # [2*dim]
    fo_w = params["fc_out_w"]      # [out_dim, dim]
    fo_b = params["fc_out_b"]      # [out_dim]

    two_dim, D = fc_w.shape
    dim = two_dim // 2
    out_dim = fo_w.shape[0]

    D_p = _round_up(D, lane)
    dim_p = _round_up(dim, lane)
    out_p = _round_up(out_dim, lane)

    wg = jnp.zeros((D_p, dim_p), fc_w.dtype).at[:D, :dim].set(fc_w[:dim, :].T)
    wb = jnp.zeros((D_p, dim_p), fc_w.dtype).at[:D, :dim].set(fc_w[dim:, :].T)
    w1 = jnp.concatenate([wg, wb], axis=1)                  # [D_p, 2*dim_p]

    b1 = jnp.zeros((1, 2 * dim_p), fc_b.dtype)
    b1 = b1.at[0, :dim].set(fc_b[:dim])
    b1 = b1.at[0, dim_p:dim_p + dim].set(fc_b[dim:])

    wo = jnp.zeros((dim_p, out_p), fo_w.dtype).at[:dim, :out_dim].set(fo_w.T)
    bo = jnp.zeros((1, out_p), fo_b.dtype).at[0, :out_dim].set(fo_b)

    return {
        "w1": w1, "b1": b1, "wo": wo, "bo": bo,
        "in_dim": D, "in_dim_p": D_p,
        "dim": dim, "dim_p": dim_p,
        "out_dim": out_dim, "out_dim_p": out_p,
    }


# ---------------------------------------------------------------------------
# Forward wrapper
# ---------------------------------------------------------------------------
def _pad2d(a, rows, cols):
    r, c = a.shape
    if r == rows and c == cols:
        return a
    return jnp.pad(a, ((0, rows - r), (0, cols - c)))


def film_forward(x, y, prepared, *, x_film=True, batch_tile=256):
    """x, y: [B, features]; `prepared` from prepare_params()."""
    film, to_be_film = (x, y) if x_film else (y, x)

    B = film.shape[0]
    D_p = prepared["in_dim_p"]
    dim_p = prepared["dim_p"]
    out_p = prepared["out_dim_p"]
    out_dim = prepared["out_dim"]

    # Batch tile: multiple of 8 (sublane), bounded by batch_tile; pad B to a
    # multiple of TB so every grid step sees a full block.
    TB = min(batch_tile, _round_up(B, 8))
    B_p = _round_up(B, TB)
    grid = (B_p // TB,)

    film_p = _pad2d(film, B_p, D_p)
    tbf_p = _pad2d(to_be_film, B_p, dim_p)

    kernel = functools.partial(_film_kernel, dim_p=dim_p)

    out_p_arr = pl.pallas_call(
        kernel,
        out_shape=jax.ShapeDtypeStruct((B_p, out_p), x.dtype),
        grid=grid,
        in_specs=[
            pl.BlockSpec((TB, D_p), lambda i: (i, 0)),          # film tile
            pl.BlockSpec((TB, dim_p), lambda i: (i, 0)),        # to_be_film
            pl.BlockSpec((D_p, 2 * dim_p), lambda i: (0, 0)),   # fused W
            pl.BlockSpec((1, 2 * dim_p), lambda i: (0, 0)),     # fused bias
            pl.BlockSpec((dim_p, out_p), lambda i: (0, 0)),     # Wo
            pl.BlockSpec((1, out_p), lambda i: (0, 0)),         # bo
        ],
        out_specs=pl.BlockSpec((TB, out_p), lambda i: (i, 0)),
        compiler_params=pltpu.CompilerParams(
            dimension_semantics=("parallel",)),
    )(film_p, tbf_p, prepared["w1"], prepared["b1"],
      prepared["wo"], prepared["bo"])

    return out_p_arr[:B, :out_dim]


# ---------------------------------------------------------------------------
# Init + pure-JAX reference
# ---------------------------------------------------------------------------
def init_params(key, input_dim, dim, output_dim, dtype=jnp.float32):
    """Deterministic PyTorch-Linear-style uniform init."""
    k1, k2, k3, k4 = jax.random.split(key, 4)
    bound_fc = 1.0 / jnp.sqrt(input_dim)
    bound_out = 1.0 / jnp.sqrt(dim)
    return {
        "fc_w": jax.random.uniform(k1, (2 * dim, input_dim), dtype,
                                   -bound_fc, bound_fc),
        "fc_b": jax.random.uniform(k2, (2 * dim,), dtype, -bound_fc, bound_fc),
        "fc_out_w": jax.random.uniform(k3, (output_dim, dim), dtype,
                                       -bound_out, bound_out),
        "fc_out_b": jax.random.uniform(k4, (output_dim,), dtype,
                                       -bound_out, bound_out),
    }


def film_reference(x, y, params, *, x_film=True):
    film, to_be_film = (x, y) if x_film else (y, x)
    dim = params["fc_w"].shape[0] // 2
    proj = film @ params["fc_w"].T + params["fc_b"]
    gamma, beta = proj[:, :dim], proj[:, dim:2 * dim]
    h = gamma * to_be_film + beta
    return h @ params["fc_out_w"].T + params["fc_out_b"]


if __name__ == "__main__":
    B, INPUT_DIM, DIM, OUTPUT_DIM = 8, 32, 32, 16

    key = jax.random.PRNGKey(0)
    kx, ky, kp = jax.random.split(key, 3)
    x = jax.random.normal(kx, (B, INPUT_DIM), jnp.float32)
    y = jax.random.normal(ky, (B, DIM), jnp.float32)
    params = init_params(kp, INPUT_DIM, DIM, OUTPUT_DIM)

    prepared = prepare_params(params)          # one-time weight prep
    out = film_forward(x, y, prepared, x_film=True)
    out = jax.block_until_ready(out)

    ref = film_reference(x, y, params, x_film=True)
    assert out.shape == (B, OUTPUT_DIM), out.shape
    assert jnp.allclose(out, ref, atol=1e-4, rtol=1e-4), \
        float(jnp.max(jnp.abs(out - ref)))

    print("KERNEL_OK")
</pallas_src>

<mosaic_0001>
module attributes {stable_mosaic.version = 11 : i64} {
  func.func @_film_kernel(%arg0: i32, %arg1: memref<8x128xf32, #tpu.memory_space<vmem>>, %arg2: memref<8x128xf32, #tpu.memory_space<vmem>>, %arg3: memref<128x256xf32, #tpu.memory_space<vmem>>, %arg4: memref<1x256xf32, #tpu.memory_space<vmem>>, %arg5: memref<128x128xf32, #tpu.memory_space<vmem>>, %arg6: memref<1x128xf32, #tpu.memory_space<vmem>>, %arg7: memref<8x128xf32, #tpu.memory_space<vmem>>) attributes {dimension_semantics = [#tpu.dimension_semantics<parallel>], iteration_bounds = array<i64: 1>, scalar_prefetch = 0 : i64, scratch_operands = 0 : i64, tpu.core_type = #tpu.core_type<tc>, window_params = [{transform_indices = @transform_0, window_bounds = array<i64: 8, 128>}, {transform_indices = @transform_1, window_bounds = array<i64: 8, 128>}, {pipeline_mode = #tpu.pipeline_mode<synchronous>, transform_indices = @transform_2, window_bounds = array<i64: 128, 256>}, {pipeline_mode = #tpu.pipeline_mode<synchronous>, transform_indices = @transform_3, window_bounds = array<i64: 1, 256>}, {pipeline_mode = #tpu.pipeline_mode<synchronous>, transform_indices = @transform_4, window_bounds = array<i64: 128, 128>}, {pipeline_mode = #tpu.pipeline_mode<synchronous>, transform_indices = @transform_5, window_bounds = array<i64: 1, 128>}, {transform_indices = @transform_6, window_bounds = array<i64: 8, 128>}]} {
    %c0 = arith.constant 0 : index
    %c0_0 = arith.constant 0 : index
    %0 = vector.load %arg1[%c0, %c0_0] : memref<8x128xf32, #tpu.memory_space<vmem>>, vector<8x128xf32>
    %c0_1 = arith.constant 0 : index
    %c0_2 = arith.constant 0 : index
    %1 = vector.load %arg3[%c0_1, %c0_2] : memref<128x256xf32, #tpu.memory_space<vmem>>, vector<128x256xf32>
    %cst = arith.constant dense<0.000000e+00> : vector<8x256xf32>
    %2 = tpu.matmul %0, %1, %cst {dimension_numbers = #tpu.dot_dimension_numbers<[1], [0], [0], [1], [0, 0, 1, 1], [], []>} : vector<8x128xf32>, vector<128x256xf32>, vector<8x256xf32> -> vector<8x256xf32>
    %c0_3 = arith.constant 0 : index
    %c0_4 = arith.constant 0 : index
    %3 = vector.load %arg4[%c0_3, %c0_4] : memref<1x256xf32, #tpu.memory_space<vmem>>, vector<1x256xf32>
    %4 = vector.broadcast %3 : vector<1x256xf32> to vector<8x256xf32>
    %5 = arith.addf %2, %4 : vector<8x256xf32>
    %6 = vector.extract_strided_slice %5 {offsets = [0, 0], sizes = [8, 128], strides = [1, 1]} : vector<8x256xf32> to vector<8x128xf32>
    %7 = vector.extract_strided_slice %5 {offsets = [0, 128], sizes = [8, 128], strides = [1, 1]} : vector<8x256xf32> to vector<8x128xf32>
    %c0_5 = arith.constant 0 : index
    %c0_6 = arith.constant 0 : index
    %8 = vector.load %arg2[%c0_5, %c0_6] : memref<8x128xf32, #tpu.memory_space<vmem>>, vector<8x128xf32>
    %9 = arith.mulf %6, %8 : vector<8x128xf32>
    %10 = arith.addf %9, %7 : vector<8x128xf32>
    %c0_7 = arith.constant 0 : index
    %c0_8 = arith.constant 0 : index
    %11 = vector.load %arg5[%c0_7, %c0_8] : memref<128x128xf32, #tpu.memory_space<vmem>>, vector<128x128xf32>
    %cst_9 = arith.constant dense<0.000000e+00> : vector<8x128xf32>
    %12 = tpu.matmul %10, %11, %cst_9 {dimension_numbers = #tpu.dot_dimension_numbers<[1], [0], [0], [1], [0, 0, 1, 1], [], []>} : vector<8x128xf32>, vector<128x128xf32>, vector<8x128xf32> -> vector<8x128xf32>
    %c0_10 = arith.constant 0 : index
    %c0_11 = arith.constant 0 : index
    %13 = vector.load %arg6[%c0_10, %c0_11] : memref<1x128xf32, #tpu.memory_space<vmem>>, vector<1x128xf32>
    %14 = vector.broadcast %13 : vector<1x128xf32> to vector<8x128xf32>
    %15 = arith.addf %12, %14 : vector<8x128xf32>
    %c0_12 = arith.constant 0 : index
    %c0_13 = arith.constant 0 : index
    %16 = vector.load %arg7[%c0_12, %c0_13] : memref<8x128xf32, #tpu.memory_space<vmem>>, vector<8x128xf32>
    tpu.vector_store %arg7[%c0_12, %c0_13], %15 {strides = array<i32>} : memref<8x128xf32, #tpu.memory_space<vmem>>, vector<8x128xf32>,
    return
  }
  func.func @transform_0(%arg0: i32) -> (i32, i32) {
    %c0_i32 = arith.constant 0 : i32
    %c0_i32_0 = arith.constant 0 : i32
    return %arg0, %c0_i32 : i32, i32
  }
  func.func @transform_1(%arg0: i32) -> (i32, i32) {
    %c0_i32 = arith.constant 0 : i32
    %c0_i32_0 = arith.constant 0 : i32
    return %arg0, %c0_i32 : i32, i32
  }
  func.func @transform_2(%arg0: i32) -> (i32, i32) {
    %c0_i32 = arith.constant 0 : i32
    %c0_i32_0 = arith.constant 0 : i32
    %c0_i32_1 = arith.constant 0 : i32
    return %c0_i32, %c0_i32_0 : i32, i32
  }
  func.func @transform_3(%arg0: i32) -> (i32, i32) {
    %c0_i32 = arith.constant 0 : i32
    %c0_i32_0 = arith.constant 0 : i32
    %c0_i32_1 = arith.constant 0 : i32
    return %c0_i32, %c0_i32_0 : i32, i32
  }
  func.func @transform_4(%arg0: i32) -> (i32, i32) {
    %c0_i32 = arith.constant 0 : i32
    %c0_i32_0 = arith.constant 0 : i32
    %c0_i32_1 = arith.constant 0 : i32
    return %c0_i32, %c0_i32_0 : i32, i32
  }
  func.func @transform_5(%arg0: i32) -> (i32, i32) {
    %c0_i32 = arith.constant 0 : i32
    %c0_i32_0 = arith.constant 0 : i32
    %c0_i32_1 = arith.constant 0 : i32
    return %c0_i32, %c0_i32_0 : i32, i32
  }
  func.func @transform_6(%arg0: i32) -> (i32, i32) {
    %c0_i32 = arith.constant 0 : i32
    %c0_i32_0 = arith.constant 0 : i32
    return %arg0, %c0_i32 : i32, i32
  }
}

</mosaic_0001>

<llo_original>
// kernel: tpu_custom_call.1
$region0: #{tpu_custom_call.1}
  #allocation0 [shape = 'u32[]', space=smem, size = 0x4, offset = 0x4, fixed_abs, tag = 'smem constant byte address 0x4 - core index']
  #allocation1 [shape = 'u32[72,128]{1,0:T(1,128)}', space=vmem, size = 0x9000, scoped, tag = 'internal scratch']
  %s0 = inlined_call_operand.hbm [shape: f32[8,128], index: 0, kind: input, shape index: {}]
  %s1 = inlined_call_operand.hbm [shape: f32[8,128], index: 1, kind: input, shape index: {}]
  %s2 = inlined_call_operand.hbm [shape: f32[128,256], index: 2, kind: input, shape index: {}]
  %s3 = inlined_call_operand.vmem [shape: f32[1,256], index: 3, kind: input, shape index: {}]
  %s4 = inlined_call_operand.hbm [shape: f32[128,128], index: 4, kind: input, shape index: {}]
  %s5 = inlined_call_operand.vmem [shape: f32[1,128], index: 5, kind: input, shape index: {}]
  %s6 = inlined_call_operand.hbm [shape: f32[8,128], index: 6, kind: output, shape index: {}]
  %s7 = sld [smem:[#allocation0]]
  $region50: #{tpu_custom_call.1} parent=0
    _
  %s9 = ssub.s32 1, %s7
  %s10 = scalar_select 0, %s9, %s7
  $region1: #{tpu_custom_call.1} parent=0
    #allocation2 [shape = 'u8[4096]{0}', space=vmem, size = 0x1000, scoped, tag = 'input window, operand 0, single buffered']
    #allocation3 [shape = 's32[1]{0}', space=sflag, size = 0x4, scoped, tag = 'scoped memory for tpu_custom_call.1']
    #allocation4 [shape = 's32[1]{0}', space=sflag, size = 0x4, scoped, tag = 'scoped memory for tpu_custom_call.1']
    #allocation5 [shape = 'u8[4096]{0}', space=vmem, size = 0x1000, scoped, tag = 'input window, operand 1, single buffered']
    #allocation6 [shape = 's32[1]{0}', space=sflag, size = 0x4, scoped, tag = 'scoped memory for tpu_custom_call.1']
    #allocation7 [shape = 'u8[131072]{0}', space=vmem, size = 0x20000, scoped, tag = 'input window, operand 2, single buffered']
    #allocation8 [shape = 'u8[65536]{0}', space=vmem, size = 0x10000, scoped, tag = 'input window, operand 4, single buffered']
    #allocation9 [shape = 's32[1]{0}', space=sflag, size = 0x4, scoped, tag = 'scoped memory for tpu_custom_call.1']
    #allocation10 [shape = 'u8[4096]{0}', space=vmem, size = 0x1000, scoped, tag = 'output window, operand 0, single buffered']
    %11 = vsyncpa [#allocation3], 0
    %12 = vsyncpa [#allocation6], 0
    %13 = vsyncpa [#allocation9], 0
    %14 = vsyncpa [#allocation4], 0
    // Predicated region
    $region2: #{tpu_custom_call.1} parent=1 // pred_check
      _
    $region3: #{tpu_custom_call.1} parent=1 // pred_check_branch
      %16 = sbr.rel (0) target = $region5
    $region4: #{tpu_custom_call.1} parent=1 // pred_region
      %18 = vsyncadd [#allocation3], 0
      %s20 = sshll.u32 %s0, 4
      %s21 = int_to_ptr.hbm [resolvable:$true] %s20
      %s22 = sshll.u32 [#allocation2], 4
      %s23 = int_to_ptr.vmem [resolvable:$true] %s22
      %25 = dma.hbm_to_vmem [thread:$0]  %s21, 128, %s23, [#allocation3]
    $region5: #{tpu_custom_call.1} parent=1 // pred_fallthru
      _
    // Predicated region
    $region6: #{tpu_custom_call.1} parent=1 // pred_check
      _
    $region7: #{tpu_custom_call.1} parent=1 // pred_check_branch
      %27 = sbr.rel (0) target = $region9
    $region8: #{tpu_custom_call.1} parent=1 // pred_region
      %29 = vsyncadd [#allocation6], 0
      %s31 = sshll.u32 %s1, 4
      %s32 = int_to_ptr.hbm [resolvable:$true] %s31
      %s33 = sshll.u32 [#allocation5], 4
      %s34 = int_to_ptr.vmem [resolvable:$true] %s33
      %36 = dma.hbm_to_vmem [thread:$0]  %s32, 128, %s34, [#allocation6]
    $region9: #{tpu_custom_call.1} parent=1 // pred_fallthru
      _
    // Predicated region
    $region10: #{tpu_custom_call.1} parent=1 // pred_check
      _
    $region11: #{tpu_custom_call.1} parent=1 // pred_check_branch
      %38 = sbr.rel (0) target = $region13
    $region12: #{tpu_custom_call.1} parent=1 // pred_region
      %40 = vsyncadd [#allocation6], 0
      %s41 = sshll.u32 %s2, 4
      %s42 = int_to_ptr.hbm [resolvable:$true] %s41
      %s43 = sshll.u32 [#allocation7], 4
      %s44 = int_to_ptr.vmem [resolvable:$true] %s43
      %49 = dma.hbm_to_vmem [thread:$0]  %s42, 4096, %s44, [#allocation6], 256, 256, 16
    $region13: #{tpu_custom_call.1} parent=1 // pred_fallthru
      _
    // Predicated region
    $region14: #{tpu_custom_call.1} parent=1 // pred_check
      _
    $region15: #{tpu_custom_call.1} parent=1 // pred_check_branch
      %51 = sbr.rel (0) target = $region17
    $region16: #{tpu_custom_call.1} parent=1 // pred_region
      _
    $region17: #{tpu_custom_call.1} parent=1 // pred_fallthru
      _
    // Predicated region
    $region18: #{tpu_custom_call.1} parent=1 // pred_check
      _
    $region19: #{tpu_custom_call.1} parent=1 // pred_check_branch
      %53 = sbr.rel (0) target = $region21
    $region20: #{tpu_custom_call.1} parent=1 // pred_region
      %55 = vsyncadd [#allocation9], 0
      %s56 = sshll.u32 %s4, 4
      %s57 = int_to_ptr.hbm [resolvable:$true] %s56
      %s58 = sshll.u32 [#allocation8], 4
      %s59 = int_to_ptr.vmem [resolvable:$true] %s58
      %64 = dma.hbm_to_vmem [thread:$0]  %s57, 2048, %s59, [#allocation9], 128, 128, 8
    $region21: #{tpu_custom_call.1} parent=1 // pred_fallthru
      _
    // Predicated region
    $region22: #{tpu_custom_call.1} parent=1 // pred_check
      _
    $region23: #{tpu_custom_call.1} parent=1 // pred_check_branch
      %66 = sbr.rel (0) target = $region25
    $region24: #{tpu_custom_call.1} parent=1 // pred_region
      _
    $region25: #{tpu_custom_call.1} parent=1 // pred_fallthru
      _
    // Predicated region
    $region26: #{tpu_custom_call.1} parent=1 // pred_check
      _
    $region27: #{tpu_custom_call.1} parent=1 // pred_check_branch
      %68 = sbr.rel (0) target = $region29
    $region28: #{tpu_custom_call.1} parent=1 // pred_region
      %70 = dma.done [#allocation3], 128
    $region29: #{tpu_custom_call.1} parent=1 // pred_fallthru
      _
    // Predicated region
    $region30: #{tpu_custom_call.1} parent=1 // pred_check
      _
    $region31: #{tpu_custom_call.1} parent=1 // pred_check_branch
      %72 = sbr.rel (0) target = $region33
    $region32: #{tpu_custom_call.1} parent=1 // pred_region
      %74 = dma.done [#allocation6], 128
    $region33: #{tpu_custom_call.1} parent=1 // pred_fallthru
      _
    // Predicated region
    $region34: #{tpu_custom_call.1} parent=1 // pred_check
      _
    $region35: #{tpu_custom_call.1} parent=1 // pred_check_branch
      %76 = sbr.rel (0) target = $region37
    $region36: #{tpu_custom_call.1} parent=1 // pred_region
      %78 = dma.done [#allocation6], 4096
    $region37: #{tpu_custom_call.1} parent=1 // pred_fallthru
      _
    // Predicated region
    $region38: #{tpu_custom_call.1} parent=1 // pred_check
      _
    $region39: #{tpu_custom_call.1} parent=1 // pred_check_branch
      %80 = sbr.rel (0) target = $region41
    $region40: #{tpu_custom_call.1} parent=1 // pred_region
      %82 = dma.done [#allocation9], 2048
    $region41: #{tpu_custom_call.1} parent=1 // pred_fallthru
      _
    %v83 = vld [vmem:[#allocation2] sm:$0xff]
    %v84 = vld [vmem:[#allocation7] sm:$0xff]
    %v85 = vld [vmem:[#allocation7 + $0x8] sm:$0xff]
    %v86 = vld [vmem:[#allocation7 + $0x10] sm:$0xff]
    %v87 = vld [vmem:[#allocation7 + $0x18] sm:$0xff]
    %v88 = vld [vmem:[#allocation7 + $0x20] sm:$0xff]
    %v89 = vld [vmem:[#allocation7 + $0x28] sm:$0xff]
    %v90 = vld [vmem:[#allocation7 + $0x30] sm:$0xff]
    %v91 = vld [vmem:[#allocation7 + $0x38] sm:$0xff]
    %v92 = vld [vmem:[#allocation7 + $0x40] sm:$0xff]
    %v93 = vld [vmem:[#allocation7 + $0x48] sm:$0xff]
    %v94 = vld [vmem:[#allocation7 + $0x50] sm:$0xff]
    %v95 = vld [vmem:[#allocation7 + $0x58] sm:$0xff]
    %v96 = vld [vmem:[#allocation7 + $0x60] sm:$0xff]
    %v97 = vld [vmem:[#allocation7 + $0x68] sm:$0xff]
    %v98 = vld [vmem:[#allocation7 + $0x70] sm:$0xff]
    %v99 = vld [vmem:[#allocation7 + $0x78] sm:$0xff]
    %v100 = vld [vmem:[#allocation7 + $0x80] sm:$0xff]
    %v101 = vld [vmem:[#allocation7 + $0x88] sm:$0xff]
    %v102 = vld [vmem:[#allocation7 + $0x90] sm:$0xff]
    %v103 = vld [vmem:[#allocation7 + $0x98] sm:$0xff]
    %v104 = vld [vmem:[#allocation7 + $0xa0] sm:$0xff]
    %v105 = vld [vmem:[#allocation7 + $0xa8] sm:$0xff]
    %v106 = vld [vmem:[#allocation7 + $0xb0] sm:$0xff]
    %v107 = vld [vmem:[#allocation7 + $0xb8] sm:$0xff]
    %v108 = vld [vmem:[#allocation7 + $0xc0] sm:$0xff]
    %v109 = vld [vmem:[#allocation7 + $0xc8] sm:$0xff]
    %v110 = vld [vmem:[#allocation7 + $0xd0] sm:$0xff]
    %v111 = vld [vmem:[#allocation7 + $0xd8] sm:$0xff]
    %v112 = vld [vmem:[#allocation7 + $0xe0] sm:$0xff]
    %v113 = vld [vmem:[#allocation7 + $0xe8] sm:$0xff]
    %v114 = vld [vmem:[#allocation7 + $0xf0] sm:$0xff]
    %v115 = vld [vmem:[#allocation7 + $0xf8] sm:$0xff]
    %v116 = vld [vmem:[%s3] sm:$0x3]
    %v118 = vperm.slane %v116, 0
    %v119 = vperm.slane %v116, 1
    %122 = vmatpush.msra.mxu0 %v114
    %123 = vmatpush.msra.mxu0 %v112
    %124 = vmatpush.msra.mxu0 %v110
    %125 = vmatpush.msra.mxu0 %v108
    %126 = vmatpush.msra.mxu0 %v106
    %127 = vmatpush.msra.mxu0 %v104
    %128 = vmatpush.msra.mxu0 %v102
    %129 = vmatpush.msra.mxu0 %v100
    %130 = vmatpush.msra.mxu0 %v98
    %131 = vmatpush.msra.mxu0 %v96
    %132 = vmatpush.msra.mxu0 %v94
    %133 = vmatpush.msra.mxu0 %v92
    %134 = vmatpush.msra.mxu0 %v90
    %135 = vmatpush.msra.mxu0 %v88
    %136 = vmatpush.msra.mxu0 %v86
    %137 = vmatpush.msra.mxu0 %v84
    %138 = vmatmul.f32.gmra.mxu0 %v83
    %v139 = vpop.f32.mrf.mxu0
    %v140 = vadd.f32 %v118, %v139
    %141 = vdwg.mxu0
    %142 = vmatpush.msra.mxu0 %v115
    %143 = vmatpush.msra.mxu0 %v113
    %144 = vmatpush.msra.mxu0 %v111
    %145 = vmatpush.msra.mxu0 %v109
    %146 = vmatpush.msra.mxu0 %v107
    %147 = vmatpush.msra.mxu0 %v105
    %148 = vmatpush.msra.mxu0 %v103
    %149 = vmatpush.msra.mxu0 %v101
    %150 = vmatpush.msra.mxu0 %v99
    %151 = vmatpush.msra.mxu0 %v97
    %152 = vmatpush.msra.mxu0 %v95
    %153 = vmatpush.msra.mxu0 %v93
    %154 = vmatpush.msra.mxu0 %v91
    %155 = vmatpush.msra.mxu0 %v89
    %156 = vmatpush.msra.mxu0 %v87
    %157 = vmatpush.msra.mxu0 %v85
    %158 = vmatmul.f32.gmra.mxu0 %v83
    %v159 = vpop.f32.mrf.mxu0
    %v160 = vadd.f32 %v119, %v159
    %161 = vdwg.mxu0
    %v162 = vld [vmem:[#allocation5] sm:$0xff]
    %v163 = vmul.f32 %v140, %v162
    %v164 = vadd.f32 %v163, %v160
    %v165 = vld [vmem:[#allocation8] sm:$0xff]
    %v166 = vld [vmem:[#allocation8 + $0x8] sm:$0xff]
    %v167 = vld [vmem:[#allocation8 + $0x10] sm:$0xff]
    %v168 = vld [vmem:[#allocation8 + $0x18] sm:$0xff]
    %v169 = vld [vmem:[#allocation8 + $0x20] sm:$0xff]
    %v170 = vld [vmem:[#allocation8 + $0x28] sm:$0xff]
    %v171 = vld [vmem:[#allocation8 + $0x30] sm:$0xff]
    %v172 = vld [vmem:[#allocation8 + $0x38] sm:$0xff]
    %v173 = vld [vmem:[#allocation8 + $0x40] sm:$0xff]
    %v174 = vld [vmem:[#allocation8 + $0x48] sm:$0xff]
    %v175 = vld [vmem:[#allocation8 + $0x50] sm:$0xff]
    %v176 = vld [vmem:[#allocation8 + $0x58] sm:$0xff]
    %v177 = vld [vmem:[#allocation8 + $0x60] sm:$0xff]
    %v178 = vld [vmem:[#allocation8 + $0x68] sm:$0xff]
    %v179 = vld [vmem:[#allocation8 + $0x70] sm:$0xff]
    %v180 = vld [vmem:[#allocation8 + $0x78] sm:$0xff]
    %v181 = vld [vmem:[%s5] sm:$0x1]
    %v183 = vperm.slane %v181, 0
    %185 = vmatpush.msra.mxu0 %v180
    %186 = vmatpush.msra.mxu0 %v179
    %187 = vmatpush.msra.mxu0 %v178
    %188 = vmatpush.msra.mxu0 %v177
    %189 = vmatpush.msra.mxu0 %v176
    %190 = vmatpush.msra.mxu0 %v175
    %191 = vmatpush.msra.mxu0 %v174
    %192 = vmatpush.msra.mxu0 %v173
    %193 = vmatpush.msra.mxu0 %v172
    %194 = vmatpush.msra.mxu0 %v171
    %195 = vmatpush.msra.mxu0 %v170
    %196 = vmatpush.msra.mxu0 %v169
    %197 = vmatpush.msra.mxu0 %v168
    %198 = vmatpush.msra.mxu0 %v167
    %199 = vmatpush.msra.mxu0 %v166
    %200 = vmatpush.msra.mxu0 %v165
    %201 = vmatmul.f32.gmra.mxu0 %v164
    %v202 = vpop.f32.mrf.mxu0
    %v203 = vadd.f32 %v183, %v202
    %204 = vdwg.mxu0
    %205 = vst [vmem:[#allocation10] sm:$0xff] %v203
    // Predicated region
    $region42: #{tpu_custom_call.1} parent=1 // pred_check
      _
    $region43: #{tpu_custom_call.1} parent=1 // pred_check_branch
      %207 = sbr.rel (0) target = $region45
    $region44: #{tpu_custom_call.1} parent=1 // pred_region
      %209 = vsyncadd [#allocation4], 0
      %s211 = sshll.u32 [#allocation10], 4
      %s212 = int_to_ptr.vmem [resolvable:$true] %s211
      %s213 = sshll.u32 %s6, 4
      %s214 = int_to_ptr.hbm [resolvable:$true] %s213
      %216 = dma.vmem_to_hbm [thread:$0]  %s212, 128, %s214, [#allocation4]
    $region45: #{tpu_custom_call.1} parent=1 // pred_fallthru
      _
    // Predicated region
    $region46: #{tpu_custom_call.1} parent=1 // pred_check
      _
    $region47: #{tpu_custom_call.1} parent=1 // pred_check_branch
      %218 = sbr.rel (0) target = $region49
    $region48: #{tpu_custom_call.1} parent=1 // pred_region
      %220 = dma.done [#allocation4], 128
    $region49: #{tpu_custom_call.1} parent=1 // pred_fallthru
      _
    %221 = vsyncpa [#allocation3], 1
    %222 = vsyncpa [#allocation6], 1
    %223 = vsyncpa [#allocation9], 1
    %224 = vsyncpa [#allocation4], 1

</llo_original>
